<compile_context>
chip_gen: v7x
topology: tpu7x:2x2x1
jax: 0.10.0
libtpu: 0.0.40
codegen_flags: <defaults>
</compile_context>

<pallas_src>
import functools
import math

import jax
import jax.numpy as jnp
from jax.experimental import pallas as pl
from jax.experimental.pallas import tpu as pltpu

# Keep the pure-JAX reference (and the in-kernel dots) at full f32 matmul
# precision so the correctness check is apples-to-apples.
jax.config.update("jax_default_matmul_precision", "highest")

_VMEM_LIMIT = 32 * 1024 * 1024  # safe on v5e/v6e (128 MiB phys) and v7x (64 MiB phys)


# ----------------------------------------------------------------------------
# Kernel 1: fused Linear  y = x @ W + b   (rows tiled along the grid)
# ----------------------------------------------------------------------------
def _linear_kernel(x_ref, w_ref, b_ref, o_ref):
    x = x_ref[...].astype(jnp.float32)
    w = w_ref[...].astype(jnp.float32)
    y = jnp.dot(x, w, preferred_element_type=jnp.float32)
    y = y + b_ref[...].astype(jnp.float32)
    o_ref[...] = y.astype(o_ref.dtype)


def linear_pallas(x2, w, b, *, max_row_tile=1024):
    """y = x2 @ w + b.   x2: (R, K), w: (K, N), b: (N,)  ->  (R, N)."""
    R, K = x2.shape
    Kw, N = w.shape
    assert K == Kw, f"shape mismatch: {x2.shape} @ {w.shape}"

    # Largest practical row tile: full extent if it fits, else a large multiple
    # of 8; Pallas handles the partial boundary block (garbage rows are never
    # written back), so no jnp.pad / output-slice HBM round trip is needed.
    tm = R if R <= max_row_tile else max_row_tile
    grid = (pl.cdiv(R, tm),)
    b2 = b.reshape(1, N)

    itemsize = jnp.dtype(x2.dtype).itemsize
    cost = pl.CostEstimate(
        flops=2 * R * K * N,
        transcendentals=0,
        bytes_accessed=(R * K + K * N + N + R * N) * itemsize,
    )

    return pl.pallas_call(
        _linear_kernel,
        out_shape=jax.ShapeDtypeStruct((R, N), x2.dtype),
        grid_spec=pltpu.PrefetchScalarGridSpec(
            num_scalar_prefetch=0,
            grid=grid,
            in_specs=[
                pl.BlockSpec((tm, K), lambda i: (i, 0)),
                pl.BlockSpec((K, N), lambda i: (0, 0)),
                pl.BlockSpec((1, N), lambda i: (0, 0)),
            ],
            out_specs=pl.BlockSpec((tm, N), lambda i: (i, 0)),
        ),
        compiler_params=pltpu.CompilerParams(
            dimension_semantics=("parallel",),
            vmem_limit_bytes=_VMEM_LIMIT,
        ),
        cost_estimate=cost,
    )(x2, w, b2)


# ----------------------------------------------------------------------------
# Kernel 2: causal scaled-dot-product attention over (batch*head) blocks
# ----------------------------------------------------------------------------
def _causal_attn_kernel(q_ref, k_ref, v_ref, o_ref, *, scale):
    q = q_ref[...].astype(jnp.float32)  # (hb, T, hd)
    k = k_ref[...].astype(jnp.float32)
    v = v_ref[...].astype(jnp.float32)
    T = q.shape[1]

    s = jnp.einsum("bqd,bkd->bqk", q, k, preferred_element_type=jnp.float32) * scale

    qi = jax.lax.broadcasted_iota(jnp.int32, (T, T), 0)
    ki = jax.lax.broadcasted_iota(jnp.int32, (T, T), 1)
    s = jnp.where((ki <= qi)[None, :, :], s, -1e30)  # causal mask

    m = jnp.max(s, axis=-1, keepdims=True)
    p = jnp.exp(s - m)
    l = jnp.sum(p, axis=-1, keepdims=True)
    y = jnp.einsum("bqk,bkd->bqd", p, v, preferred_element_type=jnp.float32) / l

    o_ref[...] = y.astype(o_ref.dtype)


def _largest_divisor_leq(n, cap):
    best = 1
    for d in range(1, min(n, cap) + 1):
        if n % d == 0:
            best = d
    return best


def causal_attention_pallas(q, k, v, *, max_heads_per_block=16):
    """q, k, v: (B*H, T, hd)  ->  (B*H, T, hd) causal softmax attention."""
    BH, T, hd = q.shape
    scale = 1.0 / math.sqrt(hd)

    # Batch several heads per step (amortize per-step overhead) but keep the
    # grid length >= 2 when possible so "parallel" can feed both TensorCores.
    hb = _largest_divisor_leq(BH, max_heads_per_block)
    if BH >= 2 and BH // hb < 2:
        hb = _largest_divisor_leq(BH, max(1, BH // 2))
    grid = (BH // hb,)

    itemsize = jnp.dtype(q.dtype).itemsize
    cost = pl.CostEstimate(
        flops=4 * BH * T * T * hd,
        transcendentals=BH * T * T,
        bytes_accessed=4 * BH * T * hd * itemsize,
    )

    kern = functools.partial(_causal_attn_kernel, scale=scale)
    return pl.pallas_call(
        kern,
        out_shape=jax.ShapeDtypeStruct((BH, T, hd), q.dtype),
        grid_spec=pltpu.PrefetchScalarGridSpec(
            num_scalar_prefetch=0,
            grid=grid,
            in_specs=[
                pl.BlockSpec((hb, T, hd), lambda i: (i, 0, 0)),
                pl.BlockSpec((hb, T, hd), lambda i: (i, 0, 0)),
                pl.BlockSpec((hb, T, hd), lambda i: (i, 0, 0)),
            ],
            out_specs=pl.BlockSpec((hb, T, hd), lambda i: (i, 0, 0)),
        ),
        compiler_params=pltpu.CompilerParams(
            dimension_semantics=("parallel",),
            vmem_limit_bytes=_VMEM_LIMIT,
        ),
        cost_estimate=cost,
    )(q, k, v)


# ----------------------------------------------------------------------------
# Full forward pass (weights stored in (in_features, out_features) layout)
# ----------------------------------------------------------------------------
def causal_self_attention(x, w_attn, b_attn, w_proj, b_proj, *, n_head):
    B, T, C = x.shape
    assert C % n_head == 0
    hd = C // n_head

    # c_attn: (B*T, C) @ (C, 3C) + b
    qkv = linear_pallas(x.reshape(B * T, C), w_attn, b_attn)  # (B*T, 3C)

    # Head split (wrapper-side layout plumbing, same semantics as the torch
    # split / view / transpose):
    qkv = qkv.reshape(B, T, 3, n_head, hd)
    q = qkv[:, :, 0].transpose(0, 2, 1, 3).reshape(B * n_head, T, hd)
    k = qkv[:, :, 1].transpose(0, 2, 1, 3).reshape(B * n_head, T, hd)
    v = qkv[:, :, 2].transpose(0, 2, 1, 3).reshape(B * n_head, T, hd)

    # causal scaled-dot-product attention
    y = causal_attention_pallas(q, k, v)  # (B*H, T, hd)
    y = y.reshape(B, n_head, T, hd).transpose(0, 2, 1, 3).reshape(B * T, C)

    # c_proj: (B*T, C) @ (C, C) + b    (resid_dropout is identity at p=0)
    out = linear_pallas(y, w_proj, b_proj)
    return out.reshape(B, T, C)


# ----------------------------------------------------------------------------
if __name__ == "__main__":
    B, T = 2, 8
    n_embd, n_head = 32, 4

    key = jax.random.PRNGKey(0)
    kx, kwa, kba, kwp, kbp = jax.random.split(key, 5)

    x = jax.random.normal(kx, (B, T, n_embd), dtype=jnp.float32)

    wscale = 1.0 / math.sqrt(n_embd)
    w_attn = jax.random.normal(kwa, (n_embd, 3 * n_embd), dtype=jnp.float32) * wscale
    b_attn = jax.random.normal(kba, (3 * n_embd,), dtype=jnp.float32) * 0.02
    w_proj = jax.random.normal(kwp, (n_embd, n_embd), dtype=jnp.float32) * wscale
    b_proj = jax.random.normal(kbp, (n_embd,), dtype=jnp.float32) * 0.02

    y = causal_self_attention(x, w_attn, b_attn, w_proj, b_proj, n_head=n_head)
    y = jax.block_until_ready(y)

    # Pure-JAX reference of the same forward pass (eval mode, dropout=0).
    def ref_forward(xr):
        hd = n_embd // n_head
        qkv = xr @ w_attn + b_attn
        qr, kr, vr = jnp.split(qkv, 3, axis=-1)
        qr = qr.reshape(B, T, n_head, hd).transpose(0, 2, 1, 3)
        kr = kr.reshape(B, T, n_head, hd).transpose(0, 2, 1, 3)
        vr = vr.reshape(B, T, n_head, hd).transpose(0, 2, 1, 3)
        s = (qr @ jnp.swapaxes(kr, -1, -2)) / math.sqrt(hd)
        mask = jnp.tril(jnp.ones((T, T), dtype=bool))
        s = jnp.where(mask, s, -jnp.inf)
        p = jax.nn.softmax(s, axis=-1)
        o = (p @ vr).transpose(0, 2, 1, 3).reshape(B, T, n_embd)
        return o @ w_proj + b_proj

    ref = ref_forward(x)
    max_err = float(jnp.max(jnp.abs(y - ref)))
    assert jnp.allclose(y, ref, atol=5e-4, rtol=5e-4), f"mismatch vs reference, max abs err={max_err}"

    print("KERNEL_OK")
</pallas_src>

<mosaic_0001>
module attributes {stable_mosaic.version = 11 : i64} {
  func.func @_linear_kernel(%arg0: i32, %arg1: memref<16x32xf32, #tpu.memory_space<vmem>>, %arg2: memref<32x96xf32, #tpu.memory_space<vmem>>, %arg3: memref<1x96xf32, #tpu.memory_space<vmem>>, %arg4: memref<16x96xf32, #tpu.memory_space<vmem>>) attributes {dimension_semantics = [#tpu.dimension_semantics<parallel>], iteration_bounds = array<i64: 1>, scalar_prefetch = 0 : i64, scratch_operands = 0 : i64, tpu.core_type = #tpu.core_type<tc>, window_params = [{transform_indices = @transform_0, window_bounds = array<i64: 16, 32>}, {pipeline_mode = #tpu.pipeline_mode<synchronous>, transform_indices = @transform_1, window_bounds = array<i64: 32, 96>}, {pipeline_mode = #tpu.pipeline_mode<synchronous>, transform_indices = @transform_2, window_bounds = array<i64: 1, 96>}, {transform_indices = @transform_3, window_bounds = array<i64: 16, 96>}]} {
    %c0 = arith.constant 0 : index
    %c0_0 = arith.constant 0 : index
    %0 = vector.load %arg1[%c0, %c0_0] : memref<16x32xf32, #tpu.memory_space<vmem>>, vector<16x32xf32>
    %c0_1 = arith.constant 0 : index
    %c0_2 = arith.constant 0 : index
    %1 = vector.load %arg2[%c0_1, %c0_2] : memref<32x96xf32, #tpu.memory_space<vmem>>, vector<32x96xf32>
    %cst = arith.constant dense<0.000000e+00> : vector<16x96xf32>
    %2 = tpu.matmul %0, %1, %cst {dimension_numbers = #tpu.dot_dimension_numbers<[1], [0], [0], [1], [0, 0, 1, 1], [], []>, precision = #tpu.contract_precision<fp32>} : vector<16x32xf32>, vector<32x96xf32>, vector<16x96xf32> -> vector<16x96xf32>
    %c0_3 = arith.constant 0 : index
    %c0_4 = arith.constant 0 : index
    %3 = vector.load %arg3[%c0_3, %c0_4] : memref<1x96xf32, #tpu.memory_space<vmem>>, vector<1x96xf32>
    %4 = vector.broadcast %3 : vector<1x96xf32> to vector<16x96xf32>
    %5 = arith.addf %2, %4 : vector<16x96xf32>
    %c0_5 = arith.constant 0 : index
    %c0_6 = arith.constant 0 : index
    %6 = vector.load %arg4[%c0_5, %c0_6] : memref<16x96xf32, #tpu.memory_space<vmem>>, vector<16x96xf32>
    tpu.vector_store %arg4[%c0_5, %c0_6], %5 {strides = array<i32>} : memref<16x96xf32, #tpu.memory_space<vmem>>, vector<16x96xf32>,
    return
  }
  func.func @transform_0(%arg0: i32) -> (i32, i32) {
    %c0_i32 = arith.constant 0 : i32
    %c0_i32_0 = arith.constant 0 : i32
    return %arg0, %c0_i32 : i32, i32
  }
  func.func @transform_1(%arg0: i32) -> (i32, i32) {
    %c0_i32 = arith.constant 0 : i32
    %c0_i32_0 = arith.constant 0 : i32
    %c0_i32_1 = arith.constant 0 : i32
    return %c0_i32, %c0_i32_0 : i32, i32
  }
  func.func @transform_2(%arg0: i32) -> (i32, i32) {
    %c0_i32 = arith.constant 0 : i32
    %c0_i32_0 = arith.constant 0 : i32
    %c0_i32_1 = arith.constant 0 : i32
    return %c0_i32, %c0_i32_0 : i32, i32
  }
  func.func @transform_3(%arg0: i32) -> (i32, i32) {
    %c0_i32 = arith.constant 0 : i32
    %c0_i32_0 = arith.constant 0 : i32
    return %arg0, %c0_i32 : i32, i32
  }
}

</mosaic_0001>

<llo_original>
// kernel: tpu_custom_call.1
$region0: #{tpu_custom_call.1}
  #allocation0 [shape = 'u32[]', space=smem, size = 0x4, offset = 0x4, fixed_abs, tag = 'smem constant byte address 0x4 - core index']
  #allocation1 [shape = 'u32[144,128]{1,0:T(1,128)}', space=vmem, size = 0x12000, scoped, tag = 'internal scratch']
  %s0 = inlined_call_operand.hbm [shape: f32[16,32], index: 0, kind: input, shape index: {}]
  %s1 = inlined_call_operand.hbm [shape: f32[32,96], index: 1, kind: input, shape index: {}]
  %s2 = inlined_call_operand.vmem [shape: f32[1,96], index: 2, kind: input, shape index: {}]
  %s3 = inlined_call_operand.hbm [shape: f32[16,96], index: 3, kind: output, shape index: {}]
  %s4 = sld [smem:[#allocation0]]
  $region30: #{tpu_custom_call.1} parent=0
    _
  %s6 = ssub.s32 1, %s4
  %s7 = scalar_select 0, %s6, %s4
  $region1: #{tpu_custom_call.1} parent=0
    #allocation2 [shape = 'u8[8192]{0}', space=vmem, size = 0x2000, scoped, tag = 'input window, operand 0, single buffered']
    #allocation3 [shape = 's32[1]{0}', space=sflag, size = 0x4, scoped, tag = 'scoped memory for tpu_custom_call.1']
    #allocation4 [shape = 's32[1]{0}', space=sflag, size = 0x4, scoped, tag = 'scoped memory for tpu_custom_call.1']
    #allocation5 [shape = 'u8[16384]{0}', space=vmem, size = 0x4000, scoped, tag = 'input window, operand 1, single buffered']
    #allocation6 [shape = 's32[1]{0}', space=sflag, size = 0x4, scoped, tag = 'scoped memory for tpu_custom_call.1']
    #allocation7 [shape = 'u8[8192]{0}', space=vmem, size = 0x2000, scoped, tag = 'output window, operand 0, single buffered']
    %8 = vsyncpa [#allocation3], 0
    %9 = vsyncpa [#allocation6], 0
    %10 = vsyncpa [#allocation4], 0
    // Predicated region
    $region2: #{tpu_custom_call.1} parent=1 // pred_check
      _
    $region3: #{tpu_custom_call.1} parent=1 // pred_check_branch
      %12 = sbr.rel (0) target = $region5
    $region4: #{tpu_custom_call.1} parent=1 // pred_region
      %s14 = ssub.s32 256, 256
      %15 = vsyncadd [#allocation3], %s14
      %s16 = sshll.u32 [#allocation2], 4
      %s17 = int_to_ptr.vmem [resolvable:$true] %s16
      %22 = dma.hbm_to_vmem [thread:$0]  %s0, 256, %s17, [#allocation3], 128, 128, 8
    $region5: #{tpu_custom_call.1} parent=1 // pred_fallthru
      _
    // Predicated region
    $region6: #{tpu_custom_call.1} parent=1 // pred_check
      _
    $region7: #{tpu_custom_call.1} parent=1 // pred_check_branch
      %24 = sbr.rel (0) target = $region9
    $region8: #{tpu_custom_call.1} parent=1 // pred_region
      %s26 = ssub.s32 512, 512
      %27 = vsyncadd [#allocation6], %s26
      %s28 = sshll.u32 [#allocation5], 4
      %s29 = int_to_ptr.vmem [resolvable:$true] %s28
      %34 = dma.hbm_to_vmem [thread:$0]  %s1, 512, %s29, [#allocation6], 128, 128, 8
    $region9: #{tpu_custom_call.1} parent=1 // pred_fallthru
      _
    // Predicated region
    $region10: #{tpu_custom_call.1} parent=1 // pred_check
      _
    $region11: #{tpu_custom_call.1} parent=1 // pred_check_branch
      %36 = sbr.rel (0) target = $region13
    $region12: #{tpu_custom_call.1} parent=1 // pred_region
      _
    $region13: #{tpu_custom_call.1} parent=1 // pred_fallthru
      _
    // Predicated region
    $region14: #{tpu_custom_call.1} parent=1 // pred_check
      _
    $region15: #{tpu_custom_call.1} parent=1 // pred_check_branch
      %38 = sbr.rel (0) target = $region17
    $region16: #{tpu_custom_call.1} parent=1 // pred_region
      %39 = dma.done [#allocation3], 256
    $region17: #{tpu_custom_call.1} parent=1 // pred_fallthru
      _
    // Predicated region
    $region18: #{tpu_custom_call.1} parent=1 // pred_check
      _
    $region19: #{tpu_custom_call.1} parent=1 // pred_check_branch
      %41 = sbr.rel (0) target = $region21
    $region20: #{tpu_custom_call.1} parent=1 // pred_region
      %42 = dma.done [#allocation6], 512
    $region21: #{tpu_custom_call.1} parent=1 // pred_fallthru
      _
    %v43 = vld [vmem:[#allocation2] sm:$0xff]
    %v44 = vld [vmem:[#allocation2 + $0x8] sm:$0xff]
    %v45 = vld [vmem:[#allocation5] sm:$0xff]
    %v46 = vld [vmem:[#allocation5 + $0x8] sm:$0xff]
    %v47 = vld [vmem:[#allocation5 + $0x10] sm:$0xff]
    %v48 = vld [vmem:[#allocation5 + $0x18] sm:$0xff]
    %v49 = vld [vmem:[%s2] sm:$0x1]
    %v51 = vlaneseq
    %v52 = vshrl.u32 %v51, 7
    %v53 = vsub.s32 0, %v52
    %v54 = vrot.slane %v49, %v53
    %vm56 = vcmask 261120
    %v58 = vsel %vm56, %v43, 0
    %v61 = vsel %vm56, %v44, 0
    %63 = vmatprep.subr.mxu0 0.0
    %v64 = vand.u32 %v45, 4294901760
    %65 = vmatpush1.msra.mxu0 %v64
    %66 = vmatprep.subr.mxu0 0.0
    %v67 = vand.u32 %v46, 4294901760
    %68 = vmatpush1.msra.mxu0 %v67
    %69 = vmatprep.subr.mxu0 0.0
    %v70 = vand.u32 %v47, 4294901760
    %71 = vmatpush1.msra.mxu0 %v70
    %72 = vmatprep.subr.mxu0 0.0
    %v73 = vand.u32 %v48, 4294901760
    %74 = vmatpush1.msra.mxu0 %v73
    %75 = vmatprep.subr.mxu0 0.0
    %76 = vmatpush1.msra.mxu0 0.0
    %77 = vmatprep.subr.mxu0 0.0
    %78 = vmatpush1.msra.mxu0 0.0
    %79 = vmatprep.subr.mxu0 0.0
    %80 = vmatpush1.msra.mxu0 0.0
    %81 = vmatprep.subr.mxu0 0.0
    %82 = vmatpush1.msra.mxu0 0.0
    %83 = vmatprep.subr.mxu0 0.0
    %84 = vmatpush1.msra.mxu0 0.0
    %85 = vmatprep.subr.mxu0 0.0
    %86 = vmatpush1.msra.mxu0 0.0
    %87 = vmatprep.subr.mxu0 0.0
    %88 = vmatpush1.msra.mxu0 0.0
    %89 = vmatprep.subr.mxu0 0.0
    %90 = vmatpush1.msra.mxu0 0.0
    %91 = vmatprep.subr.mxu0 0.0
    %92 = vmatpush1.msra.mxu0 0.0
    %93 = vmatprep.subr.mxu0 0.0
    %94 = vmatpush1.msra.mxu0 0.0
    %95 = vmatprep.subr.mxu0 0.0
    %96 = vmatpush1.msra.mxu0 0.0
    %97 = vmatprep.subr.mxu0 0.0
    %98 = vmatpush1.msra.mxu0 0.0
    %99 = vmatprep.subr.mxu0 0.0
    %100 = vmatpush1.msra.mxu0 0.0
    %101 = vmatprep.subr.mxu0 0.0
    %102 = vmatpush1.msra.mxu0 0.0
    %103 = vmatprep.subr.mxu0 0.0
    %104 = vmatpush1.msra.mxu0 0.0
    %105 = vmatprep.subr.mxu0 0.0
    %106 = vmatpush1.msra.mxu0 0.0
    %107 = vmatprep.subr.mxu0 0.0
    %108 = vmatpush1.msra.mxu0 0.0
    %109 = vmatprep.subr.mxu0 0.0
    %110 = vmatpush1.msra.mxu0 0.0
    %111 = vmatprep.subr.mxu0 0.0
    %112 = vmatpush1.msra.mxu0 0.0
    %113 = vmatprep.subr.mxu0 0.0
    %114 = vmatpush1.msra.mxu0 0.0
    %115 = vmatprep.subr.mxu0 0.0
    %116 = vmatpush1.msra.mxu0 0.0
    %117 = vmatprep.subr.mxu0 0.0
    %118 = vmatpush1.msra.mxu0 0.0
    %119 = vmatprep.subr.mxu0 0.0
    %120 = vmatpush1.msra.mxu0 0.0
    %121 = vmatprep.subr.mxu0 0.0
    %122 = vmatpush1.msra.mxu0 0.0
    %123 = vmatprep.subr.mxu0 0.0
    %124 = vmatpush1.msra.mxu0 0.0
    %125 = vmatprep.subr.mxu0 0.0
    %126 = vmatpush1.msra.mxu0 0.0
    %127 = vmatprep.subr.mxu0 0.0
    %128 = vmatpush1.msra.mxu0 0.0
    %129 = vmatprep.subr.mxu0 0.0
    %130 = vmatpush1.msra.mxu0 0.0
    %131 = vmatprep.mubr.f32.mxu0 0.0
    %v132 = vand.u32 %v58, 4294901760
    %v133 = vsub.f32 %v58, %v132
    %v134 = vand.u32 %v133, 4294901760
    %v135 = vsub.f32 %v133, %v134
    %v136 = vand.u32 %v135, 4294901760
    %137 = vmatmul.mubr.f32.gmra.mrb[0].mxu0 %v136
    %v138 = vpop.f32.mrb[0].mxu0
    %v139 = vadd.f32 %v54, %v138
    %v140 = vpop.f32.mrb[0].mxu0
    %141 = vmatprep.mubr.f32.mxu0 0.0
    %v142 = vand.u32 %v61, 4294901760
    %v143 = vsub.f32 %v61, %v142
    %v144 = vand.u32 %v143, 4294901760
    %v145 = vsub.f32 %v143, %v144
    %v146 = vand.u32 %v145, 4294901760
    %147 = vmatmul.mubr.f32.gmra.mrb[0].mxu0 %v146
    %v148 = vpop.f32.mrb[0].mxu0
    %v149 = vadd.f32 %v54, %v148
    %v150 = vpop.f32.mrb[0].mxu0
    %151 = vdwg.mxu0
    %152 = vmatprep.subr.mxu0 0.0
    %v153 = vand.u32 %v45, 4294901760
    %v154 = vsub.f32 %v45, %v153
    %v155 = vand.u32 %v154, 4294901760
    %v156 = vsub.f32 %v154, %v155
    %v157 = vand.u32 %v156, 4294901760
    %158 = vmatpush1.msra.mxu0 %v157
    %159 = vmatprep.subr.mxu0 0.0
    %v160 = vand.u32 %v46, 4294901760
    %v161 = vsub.f32 %v46, %v160
    %v162 = vand.u32 %v161, 4294901760
    %v163 = vsub.f32 %v161, %v162
    %v164 = vand.u32 %v163, 4294901760
    %165 = vmatpush1.msra.mxu0 %v164
    %166 = vmatprep.subr.mxu0 0.0
    %v167 = vand.u32 %v47, 4294901760
    %v168 = vsub.f32 %v47, %v167
    %v169 = vand.u32 %v168, 4294901760
    %v170 = vsub.f32 %v168, %v169
    %v171 = vand.u32 %v170, 4294901760
    %172 = vmatpush1.msra.mxu0 %v171
    %173 = vmatprep.subr.mxu0 0.0
    %v174 = vand.u32 %v48, 4294901760
    %v175 = vsub.f32 %v48, %v174
    %v176 = vand.u32 %v175, 4294901760
    %v177 = vsub.f32 %v175, %v176
    %v178 = vand.u32 %v177, 4294901760
    %179 = vmatpush1.msra.mxu0 %v178
    %180 = vmatprep.subr.mxu0 0.0
    %181 = vmatpush1.msra.mxu0 0.0
    %182 = vmatprep.subr.mxu0 0.0
    %183 = vmatpush1.msra.mxu0 0.0
    %184 = vmatprep.subr.mxu0 0.0
    %185 = vmatpush1.msra.mxu0 0.0
    %186 = vmatprep.subr.mxu0 0.0
    %187 = vmatpush1.msra.mxu0 0.0
    %188 = vmatprep.subr.mxu0 0.0
    %189 = vmatpush1.msra.mxu0 0.0
    %190 = vmatprep.subr.mxu0 0.0
    %191 = vmatpush1.msra.mxu0 0.0
    %192 = vmatprep.subr.mxu0 0.0
    %193 = vmatpush1.msra.mxu0 0.0
    %194 = vmatprep.subr.mxu0 0.0
    %195 = vmatpush1.msra.mxu0 0.0
    %196 = vmatprep.subr.mxu0 0.0
    %197 = vmatpush1.msra.mxu0 0.0
    %198 = vmatprep.subr.mxu0 0.0
    %199 = vmatpush1.msra.mxu0 0.0
    %200 = vmatprep.subr.mxu0 0.0
    %201 = vmatpush1.msra.mxu0 0.0
    %202 = vmatprep.subr.mxu0 0.0
    %203 = vmatpush1.msra.mxu0 0.0
    %204 = vmatprep.subr.mxu0 0.0
    %205 = vmatpush1.msra.mxu0 0.0
    %206 = vmatprep.subr.mxu0 0.0
    %207 = vmatpush1.msra.mxu0 0.0
    %208 = vmatprep.subr.mxu0 0.0
    %209 = vmatpush1.msra.mxu0 0.0
    %210 = vmatprep.subr.mxu0 0.0
    %211 = vmatpush1.msra.mxu0 0.0
    %212 = vmatprep.subr.mxu0 0.0
    %213 = vmatpush1.msra.mxu0 0.0
    %214 = vmatprep.subr.mxu0 0.0
    %215 = vmatpush1.msra.mxu0 0.0
    %216 = vmatprep.subr.mxu0 0.0
    %217 = vmatpush1.msra.mxu0 0.0
    %218 = vmatprep.subr.mxu0 0.0
    %219 = vmatpush1.msra.mxu0 0.0
    %220 = vmatprep.subr.mxu0 0.0
    %221 = vmatpush1.msra.mxu0 0.0
    %222 = vmatprep.subr.mxu0 0.0
    %223 = vmatpush1.msra.mxu0 0.0
    %224 = vmatprep.subr.mxu0 0.0
    %225 = vmatpush1.msra.mxu0 0.0
    %226 = vmatprep.subr.mxu0 0.0
    %227 = vmatpush1.msra.mxu0 0.0
    %228 = vmatprep.subr.mxu0 0.0
    %229 = vmatpush1.msra.mxu0 0.0
    %230 = vmatprep.subr.mxu0 0.0
    %231 = vmatpush1.msra.mxu0 0.0
    %232 = vmatprep.subr.mxu0 0.0
    %233 = vmatpush1.msra.mxu0 0.0
    %234 = vmatprep.subr.mxu0 0.0
    %235 = vmatpush1.msra.mxu0 0.0
    %236 = vmatprep.mubr.f32.mxu0 0.0
    %v237 = vand.u32 %v58, 4294901760
    %238 = vmatmul.mubr.f32.gmra.mrb[0].mxu0 %v237
    %v239 = vpop.f32.mrb[0].mxu0
    %v240 = vadd.f32 %v139, %v239
    %v241 = vpop.f32.mrb[0].mxu0
    %242 = vmatprep.mubr.f32.mxu0 0.0
    %v243 = vand.u32 %v61, 4294901760
    %244 = vmatmul.mubr.f32.gmra.mrb[0].mxu0 %v243
    %v245 = vpop.f32.mrb[0].mxu0
    %v246 = vadd.f32 %v149, %v245
    %v247 = vpop.f32.mrb[0].mxu0
    %248 = vdwg.mxu0
    %249 = vmatprep.subr.mxu0 0.0
    %v250 = vand.u32 %v45, 4294901760
    %v251 = vsub.f32 %v45, %v250
    %252 = vmatpush1.msra.mxu0 %v251
    %253 = vmatprep.subr.mxu0 0.0
    %v254 = vand.u32 %v46, 4294901760
    %v255 = vsub.f32 %v46, %v254
    %256 = vmatpush1.msra.mxu0 %v255
    %257 = vmatprep.subr.mxu0 0.0
    %v258 = vand.u32 %v47, 4294901760
    %v259 = vsub.f32 %v47, %v258
    %260 = vmatpush1.msra.mxu0 %v259
    %261 = vmatprep.subr.mxu0 0.0
    %v262 = vand.u32 %v48, 4294901760
    %v263 = vsub.f32 %v48, %v262
    %264 = vmatpush1.msra.mxu0 %v263
    %265 = vmatprep.subr.mxu0 0.0
    %266 = vmatpush1.msra.mxu0 0.0
    %267 = vmatprep.subr.mxu0 0.0
    %268 = vmatpush1.msra.mxu0 0.0
    %269 = vmatprep.subr.mxu0 0.0
    %270 = vmatpush1.msra.mxu0 0.0
    %271 = vmatprep.subr.mxu0 0.0
    %272 = vmatpush1.msra.mxu0 0.0
    %273 = vmatprep.subr.mxu0 0.0
    %274 = vmatpush1.msra.mxu0 0.0
    %275 = vmatprep.subr.mxu0 0.0
    %276 = vmatpush1.msra.mxu0 0.0
    %277 = vmatprep.subr.mxu0 0.0
    %278 = vmatpush1.msra.mxu0 0.0
    %279 = vmatprep.subr.mxu0 0.0
    %280 = vmatpush1.msra.mxu0 0.0
    %281 = vmatprep.subr.mxu0 0.0
    %282 = vmatpush1.msra.mxu0 0.0
    %283 = vmatprep.subr.mxu0 0.0
    %284 = vmatpush1.msra.mxu0 0.0
    %285 = vmatprep.subr.mxu0 0.0
    %286 = vmatpush1.msra.mxu0 0.0
    %287 = vmatprep.subr.mxu0 0.0
    %288 = vmatpush1.msra.mxu0 0.0
    %289 = vmatprep.subr.mxu0 0.0
    %290 = vmatpush1.msra.mxu0 0.0
    %291 = vmatprep.subr.mxu0 0.0
    %292 = vmatpush1.msra.mxu0 0.0
    %293 = vmatprep.subr.mxu0 0.0
    %294 = vmatpush1.msra.mxu0 0.0
    %295 = vmatprep.subr.mxu0 0.0
    %296 = vmatpush1.msra.mxu0 0.0
    %297 = vmatprep.subr.mxu0 0.0
    %298 = vmatpush1.msra.mxu0 0.0
    %299 = vmatprep.subr.mxu0 0.0
    %300 = vmatpush1.msra.mxu0 0.0
    %301 = vmatprep.subr.mxu0 0.0
    %302 = vmatpush1.msra.mxu0 0.0
    %303 = vmatprep.subr.mxu0 0.0
    %304 = vmatpush1.msra.mxu0 0.0
    %305 = vmatprep.subr.mxu0 0.0
    %306 = vmatpush1.msra.mxu0 0.0
    %307 = vmatprep.subr.mxu0 0.0
    %308 = vmatpush1.msra.mxu0 0.0
    %309 = vmatprep.subr.mxu0 0.0
    %310 = vmatpush1.msra.mxu0 0.0
    %311 = vmatprep.subr.mxu0 0.0
    %312 = vmatpush1.msra.mxu0 0.0
    %313 = vmatprep.subr.mxu0 0.0
    %314 = vmatpush1.msra.mxu0 0.0
    %315 = vmatprep.subr.mxu0 0.0
    %316 = vmatpush1.msra.mxu0 0.0
    %317 = vmatprep.subr.mxu0 0.0
    %318 = vmatpush1.msra.mxu0 0.0
    %319 = vmatprep.subr.mxu0 0.0
    %320 = vmatpush1.msra.mxu0 0.0
    %321 = vmatprep.mubr.f32.mxu0 0.0
    %v322 = vand.u32 %v58, 4294901760
    %v323 = vsub.f32 %v58, %v322
    %324 = vmatmul.mubr.f32.gmra.mrb[0].mxu0 %v323
    %v325 = vpop.f32.mrb[0].mxu0
    %v326 = vadd.f32 %v240, %v325
    %v327 = vpop.f32.mrb[0].mxu0
    %328 = vmatprep.mubr.f32.mxu0 0.0
    %v329 = vand.u32 %v61, 4294901760
    %v330 = vsub.f32 %v61, %v329
    %331 = vmatmul.mubr.f32.gmra.mrb[0].mxu0 %v330
    %v332 = vpop.f32.mrb[0].mxu0
    %v333 = vadd.f32 %v246, %v332
    %v334 = vpop.f32.mrb[0].mxu0
    %335 = vdwg.mxu0
    %336 = vmatprep.subr.mxu0 0.0
    %v337 = vand.u32 %v45, 4294901760
    %338 = vmatpush1.msra.mxu0 %v337
    %339 = vmatprep.subr.mxu0 0.0
    %v340 = vand.u32 %v46, 4294901760
    %341 = vmatpush1.msra.mxu0 %v340
    %342 = vmatprep.subr.mxu0 0.0
    %v343 = vand.u32 %v47, 4294901760
    %344 = vmatpush1.msra.mxu0 %v343
    %345 = vmatprep.subr.mxu0 0.0
    %v346 = vand.u32 %v48, 4294901760
    %347 = vmatpush1.msra.mxu0 %v346
    %348 = vmatprep.subr.mxu0 0.0
    %349 = vmatpush1.msra.mxu0 0.0
    %350 = vmatprep.subr.mxu0 0.0
    %351 = vmatpush1.msra.mxu0 0.0
    %352 = vmatprep.subr.mxu0 0.0
    %353 = vmatpush1.msra.mxu0 0.0
    %354 = vmatprep.subr.mxu0 0.0
    %355 = vmatpush1.msra.mxu0 0.0
    %356 = vmatprep.subr.mxu0 0.0
    %357 = vmatpush1.msra.mxu0 0.0
    %358 = vmatprep.subr.mxu0 0.0
    %359 = vmatpush1.msra.mxu0 0.0
    %360 = vmatprep.subr.mxu0 0.0
    %361 = vmatpush1.msra.mxu0 0.0
    %362 = vmatprep.subr.mxu0 0.0
    %363 = vmatpush1.msra.mxu0 0.0
    %364 = vmatprep.subr.mxu0 0.0
    %365 = vmatpush1.msra.mxu0 0.0
    %366 = vmatprep.subr.mxu0 0.0
    %367 = vmatpush1.msra.mxu0 0.0
    %368 = vmatprep.subr.mxu0 0.0
    %369 = vmatpush1.msra.mxu0 0.0
    %370 = vmatprep.subr.mxu0 0.0
    %371 = vmatpush1.msra.mxu0 0.0
    %372 = vmatprep.subr.mxu0 0.0
    %373 = vmatpush1.msra.mxu0 0.0
    %374 = vmatprep.subr.mxu0 0.0
    %375 = vmatpush1.msra.mxu0 0.0
    %376 = vmatprep.subr.mxu0 0.0
    %377 = vmatpush1.msra.mxu0 0.0
    %378 = vmatprep.subr.mxu0 0.0
    %379 = vmatpush1.msra.mxu0 0.0
    %380 = vmatprep.subr.mxu0 0.0
    %381 = vmatpush1.msra.mxu0 0.0
    %382 = vmatprep.subr.mxu0 0.0
    %383 = vmatpush1.msra.mxu0 0.0
    %384 = vmatprep.subr.mxu0 0.0
    %385 = vmatpush1.msra.mxu0 0.0
    %386 = vmatprep.subr.mxu0 0.0
    %387 = vmatpush1.msra.mxu0 0.0
    %388 = vmatprep.subr.mxu0 0.0
    %389 = vmatpush1.msra.mxu0 0.0
    %390 = vmatprep.subr.mxu0 0.0
    %391 = vmatpush1.msra.mxu0 0.0
    %392 = vmatprep.subr.mxu0 0.0
    %393 = vmatpush1.msra.mxu0 0.0
    %394 = vmatprep.subr.mxu0 0.0
    %395 = vmatpush1.msra.mxu0 0.0
    %396 = vmatprep.subr.mxu0 0.0
    %397 = vmatpush1.msra.mxu0 0.0
    %398 = vmatprep.subr.mxu0 0.0
    %399 = vmatpush1.msra.mxu0 0.0
    %400 = vmatprep.subr.mxu0 0.0
    %401 = vmatpush1.msra.mxu0 0.0
    %402 = vmatprep.subr.mxu0 0.0
    %403 = vmatpush1.msra.mxu0 0.0
    %404 = vmatprep.mubr.f32.mxu0 0.0
    %v405 = vand.u32 %v58, 4294901760
    %v406 = vsub.f32 %v58, %v405
    %v407 = vand.u32 %v406, 4294901760
    %408 = vmatmul.mubr.f32.gmra.mrb[0].mxu0 %v407
    %v409 = vpop.f32.mrb[0].mxu0
    %v410 = vadd.f32 %v326, %v409
    %v411 = vpop.f32.mrb[0].mxu0
    %412 = vmatprep.mubr.f32.mxu0 0.0
    %v413 = vand.u32 %v61, 4294901760
    %v414 = vsub.f32 %v61, %v413
    %v415 = vand.u32 %v414, 4294901760
    %416 = vmatmul.mubr.f32.gmra.mrb[0].mxu0 %v415
    %v417 = vpop.f32.mrb[0].mxu0
    %v418 = vadd.f32 %v333, %v417
    %v419 = vpop.f32.mrb[0].mxu0
    %420 = vdwg.mxu0
    %421 = vmatprep.subr.mxu0 0.0
    %v422 = vand.u32 %v45, 4294901760
    %v423 = vsub.f32 %v45, %v422
    %v424 = vand.u32 %v423, 4294901760
    %425 = vmatpush1.msra.mxu0 %v424
    %426 = vmatprep.subr.mxu0 0.0
    %v427 = vand.u32 %v46, 4294901760
    %v428 = vsub.f32 %v46, %v427
    %v429 = vand.u32 %v428, 4294901760
    %430 = vmatpush1.msra.mxu0 %v429
    %431 = vmatprep.subr.mxu0 0.0
    %v432 = vand.u32 %v47, 4294901760
    %v433 = vsub.f32 %v47, %v432
    %v434 = vand.u32 %v433, 4294901760
    %435 = vmatpush1.msra.mxu0 %v434
    %436 = vmatprep.subr.mxu0 0.0
    %v437 = vand.u32 %v48, 4294901760
    %v438 = vsub.f32 %v48, %v437
    %v439 = vand.u32 %v438, 4294901760
    %440 = vmatpush1.msra.mxu0 %v439
    %441 = vmatprep.subr.mxu0 0.0
    %442 = vmatpush1.msra.mxu0 0.0
    %443 = vmatprep.subr.mxu0 0.0
    %444 = vmatpush1.msra.mxu0 0.0
    %445 = vmatprep.subr.mxu0 0.0
    %446 = vmatpush1.msra.mxu0 0.0
    %447 = vmatprep.subr.mxu0 0.0
    %448 = vmatpush1.msra.mxu0 0.0
    %449 = vmatprep.subr.mxu0 0.0
    %450 = vmatpush1.msra.mxu0 0.0
    %451 = vmatprep.subr.mxu0 0.0
    %452 = vmatpush1.msra.mxu0 0.0
    %453 = vmatprep.subr.mxu0 0.0
    %454 = vmatpush1.msra.mxu0 0.0
    %455 = vmatprep.subr.mxu0 0.0
    %456 = vmatpush1.msra.mxu0 0.0
    %457 = vmatprep.subr.mxu0 0.0
    %458 = vmatpush1.msra.mxu0 0.0
    %459 = vmatprep.subr.mxu0 0.0
    %460 = vmatpush1.msra.mxu0 0.0
    %461 = vmatprep.subr.mxu0 0.0
    %462 = vmatpush1.msra.mxu0 0.0
    %463 = vmatprep.subr.mxu0 0.0
    %464 = vmatpush1.msra.mxu0 0.0
    %465 = vmatprep.subr.mxu0 0.0
    %466 = vmatpush1.msra.mxu0 0.0
    %467 = vmatprep.subr.mxu0 0.0
    %468 = vmatpush1.msra.mxu0 0.0
    %469 = vmatprep.subr.mxu0 0.0
    %470 = vmatpush1.msra.mxu0 0.0
    %471 = vmatprep.subr.mxu0 0.0
    %472 = vmatpush1.msra.mxu0 0.0
    %473 = vmatprep.subr.mxu0 0.0
    %474 = vmatpush1.msra.mxu0 0.0
    %475 = vmatprep.subr.mxu0 0.0
    %476 = vmatpush1.msra.mxu0 0.0
    %477 = vmatprep.subr.mxu0 0.0
    %478 = vmatpush1.msra.mxu0 0.0
    %479 = vmatprep.subr.mxu0 0.0
    %480 = vmatpush1.msra.mxu0 0.0
    %481 = vmatprep.subr.mxu0 0.0
    %482 = vmatpush1.msra.mxu0 0.0
    %483 = vmatprep.subr.mxu0 0.0
    %484 = vmatpush1.msra.mxu0 0.0
    %485 = vmatprep.subr.mxu0 0.0
    %486 = vmatpush1.msra.mxu0 0.0
    %487 = vmatprep.subr.mxu0 0.0
    %488 = vmatpush1.msra.mxu0 0.0
    %489 = vmatprep.subr.mxu0 0.0
    %490 = vmatpush1.msra.mxu0 0.0
    %491 = vmatprep.subr.mxu0 0.0
    %492 = vmatpush1.msra.mxu0 0.0
    %493 = vmatprep.subr.mxu0 0.0
    %494 = vmatpush1.msra.mxu0 0.0
    %495 = vmatprep.subr.mxu0 0.0
    %496 = vmatpush1.msra.mxu0 0.0
    %497 = vmatprep.mubr.f32.mxu0 0.0
    %v498 = vand.u32 %v58, 4294901760
    %499 = vmatmul.mubr.f32.gmra.mrb[0].mxu0 %v498
    %v500 = vpop.f32.mrb[0].mxu0
    %v501 = vadd.f32 %v410, %v500
    %v502 = vpop.f32.mrb[0].mxu0
    %503 = vmatprep.mubr.f32.mxu0 0.0
    %v504 = vand.u32 %v61, 4294901760
    %505 = vmatmul.mubr.f32.gmra.mrb[0].mxu0 %v504
    %v506 = vpop.f32.mrb[0].mxu0
    %v507 = vadd.f32 %v418, %v506
    %v508 = vpop.f32.mrb[0].mxu0
    %509 = vdwg.mxu0
    %510 = vmatprep.subr.mxu0 0.0
    %v511 = vand.u32 %v45, 4294901760
    %512 = vmatpush1.msra.mxu0 %v511
    %513 = vmatprep.subr.mxu0 0.0
    %v514 = vand.u32 %v46, 4294901760
    %515 = vmatpush1.msra.mxu0 %v514
    %516 = vmatprep.subr.mxu0 0.0
    %v517 = vand.u32 %v47, 4294901760
    %518 = vmatpush1.msra.mxu0 %v517
    %519 = vmatprep.subr.mxu0 0.0
    %v520 = vand.u32 %v48, 4294901760
    %521 = vmatpush1.msra.mxu0 %v520
    %522 = vmatprep.subr.mxu0 0.0
    %523 = vmatpush1.msra.mxu0 0.0
    %524 = vmatprep.subr.mxu0 0.0
    %525 = vmatpush1.msra.mxu0 0.0
    %526 = vmatprep.subr.mxu0 0.0
    %527 = vmatpush1.msra.mxu0 0.0
    %528 = vmatprep.subr.mxu0 0.0
    %529 = vmatpush1.msra.mxu0 0.0
    %530 = vmatprep.subr.mxu0 0.0
    %531 = vmatpush1.msra.mxu0 0.0
    %532 = vmatprep.subr.mxu0 0.0
    %533 = vmatpush1.msra.mxu0 0.0
    %534 = vmatprep.subr.mxu0 0.0
    %535 = vmatpush1.msra.mxu0 0.0
    %536 = vmatprep.subr.mxu0 0.0
    %537 = vmatpush1.msra.mxu0 0.0
    %538 = vmatprep.subr.mxu0 0.0
    %539 = vmatpush1.msra.mxu0 0.0
    %540 = vmatprep.subr.mxu0 0.0
    %541 = vmatpush1.msra.mxu0 0.0
    %542 = vmatprep.subr.mxu0 0.0
    %543 = vmatpush1.msra.mxu0 0.0
    %544 = vmatprep.subr.mxu0 0.0
    %545 = vmatpush1.msra.mxu0 0.0
    %546 = vmatprep.subr.mxu0 0.0
    %547 = vmatpush1.msra.mxu0 0.0
    %548 = vmatprep.subr.mxu0 0.0
    %549 = vmatpush1.msra.mxu0 0.0
    %550 = vmatprep.subr.mxu0 0.0
    %551 = vmatpush1.msra.mxu0 0.0
    %552 = vmatprep.subr.mxu0 0.0
    %553 = vmatpush1.msra.mxu0 0.0
    %554 = vmatprep.subr.mxu0 0.0
    %555 = vmatpush1.msra.mxu0 0.0
    %556 = vmatprep.subr.mxu0 0.0
    %557 = vmatpush1.msra.mxu0 0.0
    %558 = vmatprep.subr.mxu0 0.0
    %559 = vmatpush1.msra.mxu0 0.0
    %560 = vmatprep.subr.mxu0 0.0
    %561 = vmatpush1.msra.mxu0 0.0
    %562 = vmatprep.subr.mxu0 0.0
    %563 = vmatpush1.msra.mxu0 0.0
    %564 = vmatprep.subr.mxu0 0.0
    %565 = vmatpush1.msra.mxu0 0.0
    %566 = vmatprep.subr.mxu0 0.0
    %567 = vmatpush1.msra.mxu0 0.0
    %568 = vmatprep.subr.mxu0 0.0
    %569 = vmatpush1.msra.mxu0 0.0
    %570 = vmatprep.subr.mxu0 0.0
    %571 = vmatpush1.msra.mxu0 0.0
    %572 = vmatprep.subr.mxu0 0.0
    %573 = vmatpush1.msra.mxu0 0.0
    %574 = vmatprep.subr.mxu0 0.0
    %575 = vmatpush1.msra.mxu0 0.0
    %576 = vmatprep.subr.mxu0 0.0
    %577 = vmatpush1.msra.mxu0 0.0
    %578 = vmatprep.mubr.f32.mxu0 0.0
    %v579 = vand.u32 %v58, 4294901760
    %580 = vmatmul.mubr.f32.gmra.mrb[0].mxu0 %v579
    %v581 = vpop.f32.mrb[0].mxu0
    %v582 = vadd.f32 %v501, %v581
    %v583 = vpop.f32.mrb[0].mxu0
    %584 = vmatprep.mubr.f32.mxu0 0.0
    %v585 = vand.u32 %v61, 4294901760
    %586 = vmatmul.mubr.f32.gmra.mrb[0].mxu0 %v585
    %v587 = vpop.f32.mrb[0].mxu0
    %v588 = vadd.f32 %v507, %v587
    %v589 = vpop.f32.mrb[0].mxu0
    %590 = vdwg.mxu0
    %vm591 = vcmask 785408
    %592 = vst.msk [vmem:[#allocation7] sm:$0xff] %vm591, %v582
    %593 = vst.msk [vmem:[#allocation7 + $0x8] sm:$0xff] %vm591, %v588
    // Predicated region
    $region22: #{tpu_custom_call.1} parent=1 // pred_check
      _
    $region23: #{tpu_custom_call.1} parent=1 // pred_check_branch
      %595 = sbr.rel (0) target = $region25
    $region24: #{tpu_custom_call.1} parent=1 // pred_region
      %s597 = ssub.s32 256, 256
      %598 = vsyncadd [#allocation4], %s597
      %s599 = sshll.u32 [#allocation7], 4
      %s600 = int_to_ptr.vmem [resolvable:$true] %s599
      %605 = dma.vmem_to_hbm [thread:$0]  %s600, 256, %s3, [#allocation4], 128, 128, 8
    $region25: #{tpu_custom_call.1} parent=1 // pred_fallthru
      _
    // Predicated region
    $region26: #{tpu_custom_call.1} parent=1 // pred_check
      _
    $region27: #{tpu_custom_call.1} parent=1 // pred_check_branch
      %607 = sbr.rel (0) target = $region29
    $region28: #{tpu_custom_call.1} parent=1 // pred_region
      %608 = dma.done [#allocation4], 256
    $region29: #{tpu_custom_call.1} parent=1 // pred_fallthru
      _
    %609 = vsyncpa [#allocation3], 1
    %610 = vsyncpa [#allocation6], 1
    %611 = vsyncpa [#allocation4], 1

</llo_original>
